<compile_context>
chip_gen: v6e
topology: v6e:2x2x1
jax: 0.10.0
libtpu: 0.0.40
codegen_flags: <defaults>
</compile_context>

<pallas_src>
import math

import jax
import jax.numpy as jnp
import numpy as np
from jax.experimental import pallas as pl
from jax.experimental.pallas import tpu as pltpu


_LANE = 128
# Tile-sizing budget and the scoped VMEM limit we request.  ~24 MiB of per-step
# footprint fits under a 32 MiB scoped limit on every generation (raises v5e's
# 16 MiB default, leaves headroom under v7x's 64 MiB physical VMEM).
_TILE_VMEM_BUDGET = 24 << 20
_VMEM_LIMIT_BYTES = 32 << 20


def _esn_kernel_zero(x_ref, win_t_ref, wout_t_ref, b_ref, o_ref):
    # Default initial_state=None path: state0 @ W.T == 0, so the rec operand is
    # dropped entirely.  Kernel is EUP(tanh)-bound at these I/O sizes.
    pre = jnp.dot(x_ref[...], win_t_ref[...],
                  preferred_element_type=jnp.float32)              # (TM, R)
    h = jnp.tanh(pre)
    out = jnp.dot(h, wout_t_ref[...],
                  preferred_element_type=jnp.float32) + b_ref[...]  # (TM, O_pad)
    o_ref[...] = jnp.tanh(out).astype(o_ref.dtype)


def _make_esn_kernel_rec(tblk, B, R):
    def kernel(x_ref, rec_ref, win_t_ref, wout_t_ref, b_ref, o_ref):
        pre = jnp.dot(x_ref[...], win_t_ref[...],
                      preferred_element_type=jnp.float32)          # (TM, R)
        # rec is a (B, R) constant block; broadcast it over the time rows of
        # the tile instead of materializing a (TM, R) copy.  TM = tblk*B, so
        # the reshape is a pure sublane regrouping.
        pre = (pre.reshape(tblk, B, R) + rec_ref[...][None, :, :]
               ).reshape(tblk * B, R)
        h = jnp.tanh(pre)
        out = jnp.dot(h, wout_t_ref[...],
                      preferred_element_type=jnp.float32) + b_ref[...]
        o_ref[...] = jnp.tanh(out).astype(o_ref.dtype)
    return kernel


def _pick_time_block(T, B, I, R, O_pad,
                     budget_bytes=_TILE_VMEM_BUDGET, target_rows=1024):
    """Rows per grid step TM = tblk * B, sized from a VMEM budget.

    Footprint model (f32): double-buffered x/out blocks, ~2 live (TM, R)
    intermediates + the (TM, O_pad) pre-activation, plus the single-buffered
    constants (rec + Win^T + Wout^T + bias).
    """
    const = 4 * (B * R + I * R + R * O_pad + O_pad)
    per_row = 4 * (2 * I + 3 * O_pad + 2 * R)
    if budget_bytes > const:
        rows_cap = max(B, (budget_bytes - const) // per_row)
    else:
        rows_cap = B
    rows_cap = min(rows_cap, target_rows)
    tblk = max(1, min(T, rows_cap // B))
    # Keep >= 2 grid steps when the problem is big enough: lets v7x's two
    # TensorCores split the "parallel" axis and keeps DMA/compute overlapped.
    if tblk >= T and T * B >= 2 * 256:
        tblk = -(-T // 2)
    # TM must be a multiple of 8 sublanes when the grid has multiple blocks.
    # Rounding tblk up is safe because the M axis is zero-padded to n*TM.
    step = 8 // math.gcd(B, 8)
    tblk = -(-tblk // step) * step
    return tblk


def esn_forward(x, Win, W, Wout_w, Wout_b, initial_state=None):
    """ESN forward.  x: (T, B, I), Win: (R, I), W: (R, R), Wout_w: (O, R),
    Wout_b: (O,).  Returns (T, B, O)."""
    T, B, I = x.shape
    R = Win.shape[0]
    O = Wout_w.shape[0]

    # ---- one-time, loop-invariant parameter transforms (plain XLA glue) ----
    win_t = Win.T.astype(jnp.float32)                               # (I, R)
    # Lane-dense output: pad O up to a multiple of 128 so the output block is
    # stored with full `vst` (padded columns are tanh(0)=0 and sliced off).
    O_pad = max(_LANE, -(-O // _LANE) * _LANE)
    wout_t = jnp.zeros((R, O_pad), jnp.float32).at[:, :O].set(
        Wout_w.T.astype(jnp.float32))                               # (R, O_pad)
    b2d = jnp.zeros((1, O_pad), jnp.float32).at[:, :O].set(
        Wout_b.astype(jnp.float32).reshape(1, O))                   # (1, O_pad)

    # ---- collapse (T, B) -> M rows and tile the M axis ----
    M = T * B
    tblk = _pick_time_block(T, B, I, R, O_pad)
    TM = tblk * B
    n_steps = pl.cdiv(M, TM)
    M_pad = n_steps * TM

    x2 = x.reshape(M, I).astype(jnp.float32)
    if M_pad != M:
        # Zero-pad awkward row counts instead of one giant tile; padded rows
        # (and their garbage activations) are sliced off after the call.
        x2 = jnp.pad(x2, ((0, M_pad - M), (0, 0)))

    const = dict(pipeline_mode=pl.Buffered(1))   # constants: never re-fetched,
                                                 # single-buffer to save VMEM.
    compiler_params = pltpu.CompilerParams(
        dimension_semantics=("parallel",),       # row tiles are independent
        vmem_limit_bytes=_VMEM_LIMIT_BYTES)

    out_shape = jax.ShapeDtypeStruct((M_pad, O_pad), x.dtype)
    out_spec = pl.BlockSpec((TM, O_pad), lambda i: (i, 0))
    x_spec = pl.BlockSpec((TM, I), lambda i: (i, 0))
    w_specs = [
        pl.BlockSpec((I, R), lambda i: (0, 0), **const),            # Win^T
        pl.BlockSpec((R, O_pad), lambda i: (0, 0), **const),        # Wout^T
        pl.BlockSpec((1, O_pad), lambda i: (0, 0), **const),        # bias
    ]

    if initial_state is None:
        # Zeros path: no rec operand at all.
        out2 = pl.pallas_call(
            _esn_kernel_zero,
            out_shape=out_shape,
            grid_spec=pl.GridSpec(
                grid=(n_steps,),
                in_specs=[x_spec] + w_specs,
                out_specs=out_spec),
            compiler_params=compiler_params,
        )(x2, win_t, wout_t, b2d)
    else:
        # One-time loop-invariant term state0 @ W.T as a single small XLA
        # matmul (an untiled Pallas call would pull all of (R, R) W^T to VMEM).
        rec = jnp.dot(initial_state.astype(jnp.float32),
                      W.T.astype(jnp.float32))                      # (B, R)
        out2 = pl.pallas_call(
            _make_esn_kernel_rec(tblk, B, R),
            out_shape=out_shape,
            grid_spec=pl.GridSpec(
                grid=(n_steps,),
                in_specs=[x_spec,
                          pl.BlockSpec((B, R), lambda i: (0, 0), **const)]
                         + w_specs,
                out_specs=out_spec),
            compiler_params=compiler_params,
        )(x2, rec, win_t, wout_t, b2d)

    return out2[:M, :O].reshape(T, B, O)


def init_esn_params(key, input_size, reservoir_size, output_size,
                    spectral_radius=0.9):
    k1, k2, k3, k4 = jax.random.split(key, 4)
    Win = jax.random.normal(k1, (reservoir_size, input_size), jnp.float32)
    W = jax.random.normal(k2, (reservoir_size, reservoir_size), jnp.float32)
    # TODO(synk): spectral-radius rescaling needs general (complex) eigvals,
    # which has no TPU/Pallas equivalent -- done once on host with numpy.
    eigs = np.linalg.eigvals(np.asarray(W))
    W = W * np.float32(spectral_radius / np.max(np.abs(eigs)))
    # nn.Linear default init: U(-1/sqrt(R), 1/sqrt(R))
    bound = 1.0 / np.sqrt(reservoir_size)
    Wout_w = jax.random.uniform(k3, (output_size, reservoir_size), jnp.float32,
                                -bound, bound)
    Wout_b = jax.random.uniform(k4, (output_size,), jnp.float32, -bound, bound)
    return Win, jnp.asarray(W), Wout_w, Wout_b


if __name__ == "__main__":
    input_size, reservoir_size, output_size = 16, 128, 32
    B = 8

    key = jax.random.PRNGKey(0)
    kx1, kx2, kp, ks = jax.random.split(key, 4)
    Win, W, Wout_w, Wout_b = init_esn_params(
        kp, input_size, reservoir_size, output_size, spectral_radius=0.9)

    def reference(x, state0):
        h = jnp.tanh(jnp.einsum("tbi,ri->tbr", x, Win)
                     + jnp.einsum("br,sr->bs", state0, W)[None])
        return jnp.tanh(jnp.einsum("tbr,or->tbo", h, Wout_w) + Wout_b)

    # Path 1: initial_state=None -> rec operand dropped entirely (single tile).
    T1 = 8
    x1 = jax.random.normal(kx1, (T1, B, input_size), jnp.float32)
    out0 = jax.block_until_ready(esn_forward(x1, Win, W, Wout_w, Wout_b))
    ref0 = reference(x1, jnp.zeros((B, reservoir_size), jnp.float32))
    assert out0.shape == (T1, B, output_size)
    np.testing.assert_allclose(np.asarray(out0), np.asarray(ref0),
                               rtol=1e-5, atol=1e-5)

    # Path 2: explicit nonzero initial state; T chosen so the grid has 2 steps
    # and the row axis needs zero-padding (exercises the multi-step + padded
    # path and the in-kernel (B, R) rec broadcast).
    T2 = 81
    x2 = jax.random.normal(kx2, (T2, B, input_size), jnp.float32)
    state0 = jax.random.normal(ks, (B, reservoir_size), jnp.float32)
    out1 = jax.block_until_ready(
        esn_forward(x2, Win, W, Wout_w, Wout_b, initial_state=state0))
    ref1 = reference(x2, state0)
    assert out1.shape == (T2, B, output_size)
    np.testing.assert_allclose(np.asarray(out1), np.asarray(ref1),
                               rtol=1e-5, atol=1e-5)

    print("KERNEL_OK")
</pallas_src>

<mosaic_0001>
module attributes {stable_mosaic.version = 11 : i64} {
  func.func @_esn_kernel_zero(%arg0: i32, %arg1: memref<64x16xf32, #tpu.memory_space<vmem>>, %arg2: memref<16x128xf32, #tpu.memory_space<vmem>>, %arg3: memref<128x128xf32, #tpu.memory_space<vmem>>, %arg4: memref<1x128xf32, #tpu.memory_space<vmem>>, %arg5: memref<64x128xf32, #tpu.memory_space<vmem>>) attributes {dimension_semantics = [#tpu.dimension_semantics<parallel>], iteration_bounds = array<i64: 1>, scalar_prefetch = 0 : i64, scratch_operands = 0 : i64, tpu.core_type = #tpu.core_type<tc>, window_params = [{transform_indices = @transform_0, window_bounds = array<i64: 64, 16>}, {pipeline_mode = #tpu.pipeline_mode<synchronous>, transform_indices = @transform_1, window_bounds = array<i64: 16, 128>}, {pipeline_mode = #tpu.pipeline_mode<synchronous>, transform_indices = @transform_2, window_bounds = array<i64: 128, 128>}, {pipeline_mode = #tpu.pipeline_mode<synchronous>, transform_indices = @transform_3, window_bounds = array<i64: 1, 128>}, {transform_indices = @transform_4, window_bounds = array<i64: 64, 128>}]} {
    %c0 = arith.constant 0 : index
    %c0_0 = arith.constant 0 : index
    %0 = vector.load %arg1[%c0, %c0_0] : memref<64x16xf32, #tpu.memory_space<vmem>>, vector<64x16xf32>
    %c0_1 = arith.constant 0 : index
    %c0_2 = arith.constant 0 : index
    %1 = vector.load %arg2[%c0_1, %c0_2] : memref<16x128xf32, #tpu.memory_space<vmem>>, vector<16x128xf32>
    %cst = arith.constant dense<0.000000e+00> : vector<64x128xf32>
    %2 = tpu.matmul %0, %1, %cst {dimension_numbers = #tpu.dot_dimension_numbers<[1], [0], [0], [1], [0, 0, 1, 1], [], []>} : vector<64x16xf32>, vector<16x128xf32>, vector<64x128xf32> -> vector<64x128xf32>
    %3 = math.tanh %2 : vector<64x128xf32>
    %c0_3 = arith.constant 0 : index
    %c0_4 = arith.constant 0 : index
    %4 = vector.load %arg3[%c0_3, %c0_4] : memref<128x128xf32, #tpu.memory_space<vmem>>, vector<128x128xf32>
    %cst_5 = arith.constant dense<0.000000e+00> : vector<64x128xf32>
    %5 = tpu.matmul %3, %4, %cst_5 {dimension_numbers = #tpu.dot_dimension_numbers<[1], [0], [0], [1], [0, 0, 1, 1], [], []>} : vector<64x128xf32>, vector<128x128xf32>, vector<64x128xf32> -> vector<64x128xf32>
    %c0_6 = arith.constant 0 : index
    %c0_7 = arith.constant 0 : index
    %6 = vector.load %arg4[%c0_6, %c0_7] : memref<1x128xf32, #tpu.memory_space<vmem>>, vector<1x128xf32>
    %7 = vector.broadcast %6 : vector<1x128xf32> to vector<64x128xf32>
    %8 = arith.addf %5, %7 : vector<64x128xf32>
    %9 = math.tanh %8 : vector<64x128xf32>
    %c0_8 = arith.constant 0 : index
    %c0_9 = arith.constant 0 : index
    %10 = vector.load %arg5[%c0_8, %c0_9] : memref<64x128xf32, #tpu.memory_space<vmem>>, vector<64x128xf32>
    tpu.vector_store %arg5[%c0_8, %c0_9], %9 {strides = array<i32>} : memref<64x128xf32, #tpu.memory_space<vmem>>, vector<64x128xf32>,
    return
  }
  func.func @transform_0(%arg0: i32) -> (i32, i32) {
    %c0_i32 = arith.constant 0 : i32
    %c0_i32_0 = arith.constant 0 : i32
    return %arg0, %c0_i32 : i32, i32
  }
  func.func @transform_1(%arg0: i32) -> (i32, i32) {
    %c0_i32 = arith.constant 0 : i32
    %c0_i32_0 = arith.constant 0 : i32
    %c0_i32_1 = arith.constant 0 : i32
    return %c0_i32, %c0_i32_0 : i32, i32
  }
  func.func @transform_2(%arg0: i32) -> (i32, i32) {
    %c0_i32 = arith.constant 0 : i32
    %c0_i32_0 = arith.constant 0 : i32
    %c0_i32_1 = arith.constant 0 : i32
    return %c0_i32, %c0_i32_0 : i32, i32
  }
  func.func @transform_3(%arg0: i32) -> (i32, i32) {
    %c0_i32 = arith.constant 0 : i32
    %c0_i32_0 = arith.constant 0 : i32
    %c0_i32_1 = arith.constant 0 : i32
    return %c0_i32, %c0_i32_0 : i32, i32
  }
  func.func @transform_4(%arg0: i32) -> (i32, i32) {
    %c0_i32 = arith.constant 0 : i32
    %c0_i32_0 = arith.constant 0 : i32
    return %arg0, %c0_i32 : i32, i32
  }
}

</mosaic_0001>

<llo_original>
// kernel: tpu_custom_call.1
$region0: #{tpu_custom_call.1}
  #allocation0 [shape = 'u32[]', space=smem, size = 0x4, offset = 0x4, fixed_abs, tag = 'smem constant byte address 0x4 - core index']
  #allocation1 [shape = 'u32[144,128]{1,0:T(1,128)}', space=vmem, size = 0x12000, scoped, tag = 'internal scratch']
  %s0 = inlined_call_operand.vmem [shape: f32[64,16], index: 0, kind: input, shape index: {}]
  %s1 = inlined_call_operand.vmem [shape: f32[16,128], index: 1, kind: input, shape index: {}]
  %s2 = inlined_call_operand.hbm [shape: f32[128,128], index: 2, kind: input, shape index: {}]
  %s3 = inlined_call_operand.vmem [shape: f32[1,128], index: 3, kind: input, shape index: {}]
  %s4 = inlined_call_operand.hbm [shape: f32[64,128], index: 4, kind: output, shape index: {}]
  %s5 = sld [smem:[#allocation0]]
  $region30: #{tpu_custom_call.1} parent=0
    _
  %s7 = ssub.s32 1, %s5
  %s8 = scalar_select 0, %s7, %s5
  $region1: #{tpu_custom_call.1} parent=0
    #allocation2 [shape = 'u8[65536]{0}', space=vmem, size = 0x10000, scoped, tag = 'input window, operand 2, single buffered']
    #allocation3 [shape = 's32[1]{0}', space=sflag, size = 0x4, scoped, tag = 'scoped memory for tpu_custom_call.1']
    #allocation4 [shape = 's32[1]{0}', space=sflag, size = 0x4, scoped, tag = 'scoped memory for tpu_custom_call.1']
    #allocation5 [shape = 'u8[32768]{0}', space=vmem, size = 0x8000, scoped, tag = 'output window, operand 0, single buffered']
    %9 = vsyncpa [#allocation3], 0
    %10 = vsyncpa [#allocation4], 0
    // Predicated region
    $region2: #{tpu_custom_call.1} parent=1 // pred_check
      _
    $region3: #{tpu_custom_call.1} parent=1 // pred_check_branch
      %12 = sbr.rel (0) target = $region5
    $region4: #{tpu_custom_call.1} parent=1 // pred_region
      _
    $region5: #{tpu_custom_call.1} parent=1 // pred_fallthru
      _
    // Predicated region
    $region6: #{tpu_custom_call.1} parent=1 // pred_check
      _
    $region7: #{tpu_custom_call.1} parent=1 // pred_check_branch
      %14 = sbr.rel (0) target = $region9
    $region8: #{tpu_custom_call.1} parent=1 // pred_region
      _
    $region9: #{tpu_custom_call.1} parent=1 // pred_fallthru
      _
    // Predicated region
    $region10: #{tpu_custom_call.1} parent=1 // pred_check
      _
    $region11: #{tpu_custom_call.1} parent=1 // pred_check_branch
      %16 = sbr.rel (0) target = $region13
    $region12: #{tpu_custom_call.1} parent=1 // pred_region
      %s18 = ssub.s32 2048, 2048
      %19 = vsyncadd [#allocation3], %s18
      %s20 = sshll.u32 [#allocation2], 4
      %s21 = int_to_ptr.vmem [resolvable:$true] %s20
      %26 = dma.hbm_to_vmem [thread:$0]  %s2, 2048, %s21, [#allocation3], 128, 128, 8
    $region13: #{tpu_custom_call.1} parent=1 // pred_fallthru
      _
    // Predicated region
    $region14: #{tpu_custom_call.1} parent=1 // pred_check
      _
    $region15: #{tpu_custom_call.1} parent=1 // pred_check_branch
      %28 = sbr.rel (0) target = $region17
    $region16: #{tpu_custom_call.1} parent=1 // pred_region
      _
    $region17: #{tpu_custom_call.1} parent=1 // pred_fallthru
      _
    // Predicated region
    $region18: #{tpu_custom_call.1} parent=1 // pred_check
      _
    $region19: #{tpu_custom_call.1} parent=1 // pred_check_branch
      %30 = sbr.rel (0) target = $region21
    $region20: #{tpu_custom_call.1} parent=1 // pred_region
      %31 = dma.done [#allocation3], 2048
    $region21: #{tpu_custom_call.1} parent=1 // pred_fallthru
      _
    %v32 = vld [vmem:[%s0] sm:$0xff]
    %v33 = vld [vmem:[%s0 + $0x8] sm:$0xff]
    %v34 = vld [vmem:[%s0 + $0x10] sm:$0xff]
    %v35 = vld [vmem:[%s0 + $0x18] sm:$0xff]
    %v36 = vld [vmem:[%s0 + $0x20] sm:$0xff]
    %v37 = vld [vmem:[%s0 + $0x28] sm:$0xff]
    %v38 = vld [vmem:[%s0 + $0x30] sm:$0xff]
    %v39 = vld [vmem:[%s0 + $0x38] sm:$0xff]
    %v40 = vld [vmem:[%s1] sm:$0xff]
    %v41 = vld [vmem:[%s1 + $0x8] sm:$0xff]
    %vm42 = vcmask 130048
    %v44 = vsel %vm42, %v32, 0
    %v47 = vsel %vm42, %v33, 0
    %v50 = vsel %vm42, %v34, 0
    %v53 = vsel %vm42, %v35, 0
    %v56 = vsel %vm42, %v36, 0
    %v59 = vsel %vm42, %v37, 0
    %v62 = vsel %vm42, %v38, 0
    %v65 = vsel %vm42, %v39, 0
    %67 = vmatprep.subr.mxu0 0.0
    %68 = vmatpush1.msra.mxu0 0.0
    %69 = vmatprep.subr.mxu0 0.0
    %70 = vmatpush1.msra.mxu0 0.0
    %71 = vmatprep.subr.mxu0 0.0
    %72 = vmatpush1.msra.mxu0 0.0
    %73 = vmatprep.subr.mxu0 0.0
    %74 = vmatpush1.msra.mxu0 0.0
    %75 = vmatprep.subr.mxu0 0.0
    %76 = vmatpush1.msra.mxu0 0.0
    %77 = vmatprep.subr.mxu0 0.0
    %78 = vmatpush1.msra.mxu0 0.0
    %79 = vmatprep.subr.mxu0 0.0
    %80 = vmatpush1.msra.mxu0 0.0
    %81 = vmatprep.subr.mxu0 0.0
    %82 = vmatpush1.msra.mxu0 0.0
    %83 = vmatprep.subr.mxu0 0.0
    %84 = vmatpush1.msra.mxu0 0.0
    %85 = vmatprep.subr.mxu0 0.0
    %86 = vmatpush1.msra.mxu0 0.0
    %87 = vmatprep.subr.mxu0 0.0
    %88 = vmatpush1.msra.mxu0 0.0
    %89 = vmatprep.subr.mxu0 0.0
    %90 = vmatpush1.msra.mxu0 0.0
    %91 = vmatprep.subr.mxu0 0.0
    %92 = vmatpush1.msra.mxu0 0.0
    %93 = vmatprep.subr.mxu0 0.0
    %94 = vmatpush1.msra.mxu0 0.0
    %95 = vmatprep.subr.mxu0 0.0
    %96 = vmatpush1.msra.mxu0 %v41
    %97 = vmatprep.subr.mxu0 0.0
    %98 = vmatpush1.msra.mxu0 %v40
    %99 = vmatprep.subr.mxu0 0.0
    %100 = vmatpush2.msra.mxu0 0.0
    %101 = vmatprep.subr.mxu0 0.0
    %102 = vmatpush2.msra.mxu0 0.0
    %103 = vmatprep.subr.mxu0 0.0
    %104 = vmatpush2.msra.mxu0 0.0
    %105 = vmatprep.subr.mxu0 0.0
    %106 = vmatpush2.msra.mxu0 0.0
    %107 = vmatprep.subr.mxu0 0.0
    %108 = vmatpush2.msra.mxu0 0.0
    %109 = vmatprep.subr.mxu0 0.0
    %110 = vmatpush2.msra.mxu0 0.0
    %111 = vmatprep.subr.mxu0 0.0
    %112 = vmatpush2.msra.mxu0 0.0
    %113 = vmatprep.subr.mxu0 0.0
    %114 = vmatpush2.msra.mxu0 0.0
    %115 = vmatprep.subr.mxu0 0.0
    %116 = vmatpush2.msra.mxu0 0.0
    %117 = vmatprep.subr.mxu0 0.0
    %118 = vmatpush2.msra.mxu0 0.0
    %119 = vmatprep.subr.mxu0 0.0
    %120 = vmatpush2.msra.mxu0 0.0
    %121 = vmatprep.subr.mxu0 0.0
    %122 = vmatpush2.msra.mxu0 0.0
    %123 = vmatprep.subr.mxu0 0.0
    %124 = vmatpush2.msra.mxu0 0.0
    %125 = vmatprep.subr.mxu0 0.0
    %126 = vmatpush2.msra.mxu0 0.0
    %127 = vmatprep.subr.mxu0 0.0
    %128 = vmatpush2.msra.mxu0 0.0
    %129 = vmatprep.subr.mxu0 0.0
    %130 = vmatpush2.msra.mxu0 0.0
    %131 = vmatprep.mubr.f32.mxu0 0.0
    %132 = vmatmul.mubr.f32.gmra.mxu0 %v44
    %v133 = vpop.f32.mrf.mxu0
    %v134 = vadd.f32 0.0, %v133
    %v135 = vpop.f32.mrf.mxu0
    %136 = vmatprep.mubr.f32.mxu0 0.0
    %137 = vmatmul.mubr.f32.gmra.mxu0 %v47
    %v138 = vpop.f32.mrf.mxu0
    %v139 = vadd.f32 0.0, %v138
    %v140 = vpop.f32.mrf.mxu0
    %141 = vmatprep.mubr.f32.mxu0 0.0
    %142 = vmatmul.mubr.f32.gmra.mxu0 %v50
    %v143 = vpop.f32.mrf.mxu0
    %v144 = vadd.f32 0.0, %v143
    %v145 = vpop.f32.mrf.mxu0
    %146 = vmatprep.mubr.f32.mxu0 0.0
    %147 = vmatmul.mubr.f32.gmra.mxu0 %v53
    %v148 = vpop.f32.mrf.mxu0
    %v149 = vadd.f32 0.0, %v148
    %v150 = vpop.f32.mrf.mxu0
    %151 = vmatprep.mubr.f32.mxu0 0.0
    %152 = vmatmul.mubr.f32.gmra.mxu0 %v56
    %v153 = vpop.f32.mrf.mxu0
    %v154 = vadd.f32 0.0, %v153
    %v155 = vpop.f32.mrf.mxu0
    %156 = vmatprep.mubr.f32.mxu0 0.0
    %157 = vmatmul.mubr.f32.gmra.mxu0 %v59
    %v158 = vpop.f32.mrf.mxu0
    %v159 = vadd.f32 0.0, %v158
    %v160 = vpop.f32.mrf.mxu0
    %161 = vmatprep.mubr.f32.mxu0 0.0
    %162 = vmatmul.mubr.f32.gmra.mxu0 %v62
    %v163 = vpop.f32.mrf.mxu0
    %v164 = vadd.f32 0.0, %v163
    %v165 = vpop.f32.mrf.mxu0
    %166 = vmatprep.mubr.f32.mxu0 0.0
    %167 = vmatmul.mubr.f32.gmra.mxu0 %v65
    %v168 = vpop.f32.mrf.mxu0
    %v169 = vadd.f32 0.0, %v168
    %v170 = vpop.f32.mrf.mxu0
    %171 = vdwg.mxu0
    %v172 = vtanh.pop %v134
    %v173 = vtanh.pop %v139
    %v174 = vtanh.pop %v144
    %v175 = vtanh.pop %v149
    %v176 = vtanh.pop %v154
    %v177 = vtanh.pop %v159
    %v178 = vtanh.pop %v164
    %v179 = vtanh.pop %v169
    %v180 = vld [vmem:[#allocation2] sm:$0xff]
    %v181 = vld [vmem:[#allocation2 + $0x8] sm:$0xff]
    %v182 = vld [vmem:[#allocation2 + $0x10] sm:$0xff]
    %v183 = vld [vmem:[#allocation2 + $0x18] sm:$0xff]
    %v184 = vld [vmem:[#allocation2 + $0x20] sm:$0xff]
    %v185 = vld [vmem:[#allocation2 + $0x28] sm:$0xff]
    %v186 = vld [vmem:[#allocation2 + $0x30] sm:$0xff]
    %v187 = vld [vmem:[#allocation2 + $0x38] sm:$0xff]
    %v188 = vld [vmem:[#allocation2 + $0x40] sm:$0xff]
    %v189 = vld [vmem:[#allocation2 + $0x48] sm:$0xff]
    %v190 = vld [vmem:[#allocation2 + $0x50] sm:$0xff]
    %v191 = vld [vmem:[#allocation2 + $0x58] sm:$0xff]
    %v192 = vld [vmem:[#allocation2 + $0x60] sm:$0xff]
    %v193 = vld [vmem:[#allocation2 + $0x68] sm:$0xff]
    %v194 = vld [vmem:[#allocation2 + $0x70] sm:$0xff]
    %v195 = vld [vmem:[#allocation2 + $0x78] sm:$0xff]
    %v196 = vld [vmem:[%s3] sm:$0x1]
    %v198 = vlaneseq
    %v199 = vshrl.u32 %v198, 7
    %v200 = vsub.s32 0, %v199
    %v201 = vrot.slane %v196, %v200
    %203 = vmatprep.subr.mxu0 0.0
    %204 = vmatpush1.msra.mxu0 %v195
    %205 = vmatprep.subr.mxu0 0.0
    %206 = vmatpush1.msra.mxu0 %v194
    %207 = vmatprep.subr.mxu0 0.0
    %208 = vmatpush1.msra.mxu0 %v193
    %209 = vmatprep.subr.mxu0 0.0
    %210 = vmatpush1.msra.mxu0 %v192
    %211 = vmatprep.subr.mxu0 0.0
    %212 = vmatpush1.msra.mxu0 %v191
    %213 = vmatprep.subr.mxu0 0.0
    %214 = vmatpush1.msra.mxu0 %v190
    %215 = vmatprep.subr.mxu0 0.0
    %216 = vmatpush1.msra.mxu0 %v189
    %217 = vmatprep.subr.mxu0 0.0
    %218 = vmatpush1.msra.mxu0 %v188
    %219 = vmatprep.subr.mxu0 0.0
    %220 = vmatpush1.msra.mxu0 %v187
    %221 = vmatprep.subr.mxu0 0.0
    %222 = vmatpush1.msra.mxu0 %v186
    %223 = vmatprep.subr.mxu0 0.0
    %224 = vmatpush1.msra.mxu0 %v185
    %225 = vmatprep.subr.mxu0 0.0
    %226 = vmatpush1.msra.mxu0 %v184
    %227 = vmatprep.subr.mxu0 0.0
    %228 = vmatpush1.msra.mxu0 %v183
    %229 = vmatprep.subr.mxu0 0.0
    %230 = vmatpush1.msra.mxu0 %v182
    %231 = vmatprep.subr.mxu0 0.0
    %232 = vmatpush1.msra.mxu0 %v181
    %233 = vmatprep.subr.mxu0 0.0
    %234 = vmatpush1.msra.mxu0 %v180
    %235 = vmatprep.subr.mxu0 0.0
    %236 = vmatpush2.msra.mxu0 0.0
    %237 = vmatprep.subr.mxu0 0.0
    %238 = vmatpush2.msra.mxu0 0.0
    %239 = vmatprep.subr.mxu0 0.0
    %240 = vmatpush2.msra.mxu0 0.0
    %241 = vmatprep.subr.mxu0 0.0
    %242 = vmatpush2.msra.mxu0 0.0
    %243 = vmatprep.subr.mxu0 0.0
    %244 = vmatpush2.msra.mxu0 0.0
    %245 = vmatprep.subr.mxu0 0.0
    %246 = vmatpush2.msra.mxu0 0.0
    %247 = vmatprep.subr.mxu0 0.0
    %248 = vmatpush2.msra.mxu0 0.0
    %249 = vmatprep.subr.mxu0 0.0
    %250 = vmatpush2.msra.mxu0 0.0
    %251 = vmatprep.subr.mxu0 0.0
    %252 = vmatpush2.msra.mxu0 0.0
    %253 = vmatprep.subr.mxu0 0.0
    %254 = vmatpush2.msra.mxu0 0.0
    %255 = vmatprep.subr.mxu0 0.0
    %256 = vmatpush2.msra.mxu0 0.0
    %257 = vmatprep.subr.mxu0 0.0
    %258 = vmatpush2.msra.mxu0 0.0
    %259 = vmatprep.subr.mxu0 0.0
    %260 = vmatpush2.msra.mxu0 0.0
    %261 = vmatprep.subr.mxu0 0.0
    %262 = vmatpush2.msra.mxu0 0.0
    %263 = vmatprep.subr.mxu0 0.0
    %264 = vmatpush2.msra.mxu0 0.0
    %265 = vmatprep.subr.mxu0 0.0
    %266 = vmatpush2.msra.mxu0 0.0
    %267 = vmatprep.mubr.f32.mxu0 0.0
    %268 = vmatmul.mubr.f32.gmra.mxu0 %v172
    %v269 = vpop.f32.mrf.mxu0
    %v270 = vadd.f32 %v201, %v269
    %v271 = vpop.f32.mrf.mxu0
    %272 = vmatprep.mubr.f32.mxu0 0.0
    %273 = vmatmul.mubr.f32.gmra.mxu0 %v173
    %v274 = vpop.f32.mrf.mxu0
    %v275 = vadd.f32 %v201, %v274
    %v276 = vpop.f32.mrf.mxu0
    %277 = vmatprep.mubr.f32.mxu0 0.0
    %278 = vmatmul.mubr.f32.gmra.mxu0 %v174
    %v279 = vpop.f32.mrf.mxu0
    %v280 = vadd.f32 %v201, %v279
    %v281 = vpop.f32.mrf.mxu0
    %282 = vmatprep.mubr.f32.mxu0 0.0
    %283 = vmatmul.mubr.f32.gmra.mxu0 %v175
    %v284 = vpop.f32.mrf.mxu0
    %v285 = vadd.f32 %v201, %v284
    %v286 = vpop.f32.mrf.mxu0
    %287 = vmatprep.mubr.f32.mxu0 0.0
    %288 = vmatmul.mubr.f32.gmra.mxu0 %v176
    %v289 = vpop.f32.mrf.mxu0
    %v290 = vadd.f32 %v201, %v289
    %v291 = vpop.f32.mrf.mxu0
    %292 = vmatprep.mubr.f32.mxu0 0.0
    %293 = vmatmul.mubr.f32.gmra.mxu0 %v177
    %v294 = vpop.f32.mrf.mxu0
    %v295 = vadd.f32 %v201, %v294
    %v296 = vpop.f32.mrf.mxu0
    %297 = vmatprep.mubr.f32.mxu0 0.0
    %298 = vmatmul.mubr.f32.gmra.mxu0 %v178
    %v299 = vpop.f32.mrf.mxu0
    %v300 = vadd.f32 %v201, %v299
    %v301 = vpop.f32.mrf.mxu0
    %302 = vmatprep.mubr.f32.mxu0 0.0
    %303 = vmatmul.mubr.f32.gmra.mxu0 %v179
    %v304 = vpop.f32.mrf.mxu0
    %v305 = vadd.f32 %v201, %v304
    %v306 = vpop.f32.mrf.mxu0
    %307 = vdwg.mxu0
    %v308 = vtanh.pop %v270
    %v309 = vtanh.pop %v275
    %v310 = vtanh.pop %v280
    %v311 = vtanh.pop %v285
    %v312 = vtanh.pop %v290
    %v313 = vtanh.pop %v295
    %v314 = vtanh.pop %v300
    %v315 = vtanh.pop %v305
    %316 = vst [vmem:[#allocation5] sm:$0xff] %v308
    %317 = vst [vmem:[#allocation5 + $0x8] sm:$0xff] %v309
    %318 = vst [vmem:[#allocation5 + $0x10] sm:$0xff] %v310
    %319 = vst [vmem:[#allocation5 + $0x18] sm:$0xff] %v311
    %320 = vst [vmem:[#allocation5 + $0x20] sm:$0xff] %v312
    %321 = vst [vmem:[#allocation5 + $0x28] sm:$0xff] %v313
    %322 = vst [vmem:[#allocation5 + $0x30] sm:$0xff] %v314
    %323 = vst [vmem:[#allocation5 + $0x38] sm:$0xff] %v315
    // Predicated region
    $region22: #{tpu_custom_call.1} parent=1 // pred_check
      _
    $region23: #{tpu_custom_call.1} parent=1 // pred_check_branch
      %325 = sbr.rel (0) target = $region25
    $region24: #{tpu_custom_call.1} parent=1 // pred_region
      %s327 = ssub.s32 1024, 1024
      %328 = vsyncadd [#allocation4], %s327
      %s329 = sshll.u32 [#allocation5], 4
      %s330 = int_to_ptr.vmem [resolvable:$true] %s329
      %335 = dma.vmem_to_hbm [thread:$0]  %s330, 1024, %s4, [#allocation4], 128, 128, 8
    $region25: #{tpu_custom_call.1} parent=1 // pred_fallthru
      _
    // Predicated region
    $region26: #{tpu_custom_call.1} parent=1 // pred_check
      _
    $region27: #{tpu_custom_call.1} parent=1 // pred_check_branch
      %337 = sbr.rel (0) target = $region29
    $region28: #{tpu_custom_call.1} parent=1 // pred_region
      %338 = dma.done [#allocation4], 1024
    $region29: #{tpu_custom_call.1} parent=1 // pred_fallthru
      _
    %339 = vsyncpa [#allocation3], 1
    %340 = vsyncpa [#allocation4], 1

</llo_original>
